<compile_context>
chip_gen: v5e
topology: v5e:2x2
jax: 0.10.0
libtpu: 0.0.40
codegen_flags: <defaults>
</compile_context>

<pallas_src>
from functools import partial
from typing import Dict, Optional

import jax
import jax.numpy as jnp
from jax.experimental import pallas as pl
from jax.experimental.pallas import tpu as pltpu

NUM_METRICS = 7          # total, global, local, local_i2t, local_t2i, global_i2t, global_t2i
SUBLANES = 8             # metric rows padded 7 -> 8
LANES = 128
MAX_TILE_LANES = 16384   # 8 x 16384 x 4B = 512 KiB per input block (x2 double-buffered)


def _gloria_sum_kernel(loss_ref, out_ref):
    """Streaming sum over the batch (lane) axis.

    loss_ref : VMEM (8, TILE) tile -- metrics on sublanes, batches on lanes.
    out_ref  : VMEM (8, 128) resident accumulator; every lane of row m holds
               the running per-metric sum (lane-broadcast keeps stores dense).
    """
    @pl.when(pl.program_id(0) == 0)
    def _():
        out_ref[...] = jnp.zeros_like(out_ref)

    # One cross-lane reduce (XLU) per step, then a broadcast add (VPU).
    partial_sum = jnp.sum(loss_ref[...], axis=1, keepdims=True)   # (8, 1)
    out_ref[...] += partial_sum                                   # broadcast to (8, 128)


def _pallas_metric_sums(slab: jnp.ndarray) -> jnp.ndarray:
    """slab: (8, b_pad) f32, zero-padded.  Returns per-metric sums, shape (7,)."""
    b_pad = slab.shape[1]
    tile = min(b_pad, MAX_TILE_LANES)
    grid = (b_pad // tile,)

    out = pl.pallas_call(
        _gloria_sum_kernel,
        out_shape=jax.ShapeDtypeStruct((SUBLANES, LANES), jnp.float32),
        grid=grid,
        in_specs=[pl.BlockSpec((SUBLANES, tile), lambda i: (0, i))],
        out_specs=pl.BlockSpec((SUBLANES, LANES), lambda i: (0, 0)),
        compiler_params=pltpu.CompilerParams(
            dimension_semantics=("arbitrary",)),
    )(slab)

    return out[:NUM_METRICS, 0]


@jax.jit
def _metrics_from_slab(slab: jnp.ndarray, num_batches: jnp.ndarray):
    """Returns (sums[7], means[7]).  jit caches per slab shape only, so the
    (traced) batch count does not trigger recompiles."""
    sums = _pallas_metric_sums(slab)
    means = sums / num_batches.astype(jnp.float32)
    return sums, means


def gloria_metrics_pallas(loss_rows: jnp.ndarray, num_batches: int):
    """loss_rows: (num_batches, 7) f32.  Returns (sums[7], means[7])."""
    b = loss_rows.shape[0]
    # Lane padding: multiple of 128; if larger than one tile, multiple of the tile.
    b_pad = ((b + LANES - 1) // LANES) * LANES
    if b_pad > MAX_TILE_LANES:
        b_pad = ((b_pad + MAX_TILE_LANES - 1) // MAX_TILE_LANES) * MAX_TILE_LANES

    # Transposed slab: (8, b_pad).  Pad rows 7->8 and lanes b->b_pad with zeros.
    slab = jnp.pad(loss_rows.astype(jnp.float32).T,
                   ((0, SUBLANES - NUM_METRICS), (0, b_pad - b)))
    return _metrics_from_slab(slab, jnp.asarray(num_batches, dtype=jnp.float32))


class GloriaMetricsPallas:
    """JAX/Pallas re-implementation of GloriaMetrics.

    forward(loss_result, compute_metrics) mirrors the PyTorch module: it
    accumulates the 7 scalar losses of the batch and, if requested, computes
    the per-metric mean over all accumulated batches via the Pallas kernel.
    """

    _KEYS = ["loss", "global_loss", "local_loss",
             "local_loss_i2t", "local_loss_t2i",
             "global_loss_i2t", "global_loss_t2i"]

    def __init__(self, split: str = "val"):
        self.split = split
        self.reset()

    def reset(self):
        self._rows = []          # list of length-7 jnp vectors, one per batch
        self.num_batches = 0

    def update(self, loss_result) -> None:
        row = jnp.asarray([
            loss_result["total_loss"],
            loss_result["global_loss"],
            loss_result["local_loss"],
            loss_result["local_loss_image_to_text"],
            loss_result["local_loss_text_to_image"],
            loss_result["global_loss_image_to_text"],
            loss_result["global_loss_text_to_image"],
        ], dtype=jnp.float32)
        self._rows.append(row)
        self.num_batches += 1

    def compute(self) -> Dict[str, float]:
        if self.num_batches == 0:
            # TODO(synk): PyTorch version also prints a warning here.
            return {f"{self.split}_{k}": 0.0 for k in self._KEYS}
        loss_rows = jnp.stack(self._rows, axis=0)                  # (B, 7)
        _, means = gloria_metrics_pallas(loss_rows, self.num_batches)
        means = jax.block_until_ready(means)
        return {f"{self.split}_{k}": float(means[i])
                for i, k in enumerate(self._KEYS)}

    def forward(self, loss_result, compute_metrics: bool = False
                ) -> Optional[Dict[str, float]]:
        self.update(loss_result)
        if compute_metrics:
            return self.compute()
        return None

    __call__ = forward


if __name__ == "__main__":
    key = jax.random.PRNGKey(0)
    num_batches = 5

    metrics = GloriaMetricsPallas(split="val")

    # Deterministic synthetic per-batch loss results.
    all_vals = jax.random.uniform(key, (num_batches, NUM_METRICS),
                                  dtype=jnp.float32, minval=0.1, maxval=2.0)

    result = None
    for b in range(num_batches):
        v = all_vals[b]
        loss_result = {
            "total_loss": v[0],
            "global_loss": v[1],
            "local_loss": v[2],
            "local_loss_image_to_text": v[3],
            "local_loss_text_to_image": v[4],
            "global_loss_image_to_text": v[5],
            "global_loss_text_to_image": v[6],
        }
        result = metrics(loss_result, compute_metrics=(b == num_batches - 1))

    # Reference check in plain JAX: mean over batches of each metric.
    ref_means = jnp.mean(all_vals, axis=0)
    got = jnp.asarray([result[f"val_{k}"] for k in GloriaMetricsPallas._KEYS],
                      dtype=jnp.float32)
    got = jax.block_until_ready(got)
    assert jnp.allclose(got, ref_means, rtol=1e-5, atol=1e-6), (got, ref_means)

    # Second check: a larger batch count exercising multi-step accumulation.
    big_b = 2 * MAX_TILE_LANES + 300
    big_vals = jax.random.uniform(jax.random.PRNGKey(1), (big_b, NUM_METRICS),
                                  dtype=jnp.float32, minval=0.1, maxval=2.0)
    _, big_means = gloria_metrics_pallas(big_vals, big_b)
    big_means = jax.block_until_ready(big_means)
    assert jnp.allclose(big_means, jnp.mean(big_vals, axis=0),
                        rtol=1e-4, atol=1e-5), (big_means, jnp.mean(big_vals, axis=0))

    print("KERNEL_OK")
</pallas_src>

<mosaic_0001>
module attributes {stable_mosaic.version = 11 : i64} {
  func.func @_gloria_sum_kernel(%arg0: i32, %arg1: memref<8x128xf32, #tpu.memory_space<vmem>>, %arg2: memref<8x128xf32, #tpu.memory_space<vmem>>) attributes {dimension_semantics = [#tpu.dimension_semantics<arbitrary>], iteration_bounds = array<i64: 1>, scalar_prefetch = 0 : i64, scratch_operands = 0 : i64, tpu.core_type = #tpu.core_type<tc>, window_params = [{transform_indices = @transform_0, window_bounds = array<i64: 8, 128>}, {pipeline_mode = #tpu.pipeline_mode<synchronous>, transform_indices = @transform_1, window_bounds = array<i64: 8, 128>}]} {
    %c0_i32 = arith.constant 0 : i32
    %0 = arith.cmpi eq, %arg0, %c0_i32 : i32
    %1 = arith.extui %0 : i1 to i32
    %c0_i32_0 = arith.constant 0 : i32
    %2 = arith.cmpi ne, %1, %c0_i32_0 : i32
    scf.if %2 {
      %cst_6 = arith.constant 0.000000e+00 : f32
      %10 = vector.broadcast %cst_6 : f32 to vector<8x128xf32>
      %c0_7 = arith.constant 0 : index
      %c0_8 = arith.constant 0 : index
      %11 = vector.load %arg2[%c0_7, %c0_8] : memref<8x128xf32, #tpu.memory_space<vmem>>, vector<8x128xf32>
      tpu.vector_store %arg2[%c0_7, %c0_8], %10 {strides = array<i32>} : memref<8x128xf32, #tpu.memory_space<vmem>>, vector<8x128xf32>,
    } else {
    }
    %c0 = arith.constant 0 : index
    %c0_1 = arith.constant 0 : index
    %3 = vector.load %arg1[%c0, %c0_1] : memref<8x128xf32, #tpu.memory_space<vmem>>, vector<8x128xf32>
    %cst = arith.constant dense<0.000000e+00> : vector<8xf32>
    %4 = vector.multi_reduction <add>, %3, %cst [1] : vector<8x128xf32> to vector<8xf32>
    %5 = vector.shape_cast %4 : vector<8xf32> to vector<8x1xf32>
    %c0_2 = arith.constant 0 : index
    %c0_3 = arith.constant 0 : index
    %6 = vector.load %arg2[%c0_2, %c0_3] : memref<8x128xf32, #tpu.memory_space<vmem>>, vector<8x128xf32>
    %7 = vector.broadcast %5 : vector<8x1xf32> to vector<8x128xf32>
    %8 = arith.addf %6, %7 : vector<8x128xf32>
    %c0_4 = arith.constant 0 : index
    %c0_5 = arith.constant 0 : index
    %9 = vector.load %arg2[%c0_4, %c0_5] : memref<8x128xf32, #tpu.memory_space<vmem>>, vector<8x128xf32>
    tpu.vector_store %arg2[%c0_4, %c0_5], %8 {strides = array<i32>} : memref<8x128xf32, #tpu.memory_space<vmem>>, vector<8x128xf32>,
    return
  }
  func.func @transform_0(%arg0: i32) -> (i32, i32) {
    %c0_i32 = arith.constant 0 : i32
    %c0_i32_0 = arith.constant 0 : i32
    return %c0_i32, %arg0 : i32, i32
  }
  func.func @transform_1(%arg0: i32) -> (i32, i32) {
    %c0_i32 = arith.constant 0 : i32
    %c0_i32_0 = arith.constant 0 : i32
    %c0_i32_1 = arith.constant 0 : i32
    return %c0_i32, %c0_i32_0 : i32, i32
  }
}

</mosaic_0001>

<llo_original>
// kernel: _metrics_from_slab.1
$region0: #{_metrics_from_slab.1}
  #allocation0 [shape = 'u32[]', space=smem, size = 0x4, offset = 0x4, fixed_abs, tag = 'smem constant byte address 0x4 - core index']
  #allocation1 [shape = 'u32[72,128]{1,0:T(1,128)}', space=vmem, size = 0x9000, scoped, tag = 'internal scratch']
  %s0 = inlined_call_operand.hbm [shape: f32[8,128], index: 0, kind: input, shape index: {}]
  %s1 = inlined_call_operand.vmem [shape: f32[8,128], index: 1, kind: output, shape index: {}]
  %s2 = sld [smem:[#allocation0]]
  $region22: #{_metrics_from_slab.1} parent=0
    _
  %s4 = ssub.s32 1, %s2
  %s5 = scalar_select 0, %s4, %s2
  $region1: #{_metrics_from_slab.1} parent=0
    #allocation2 [shape = 'u8[4096]{0}', space=vmem, size = 0x1000, scoped, tag = 'input window, operand 0, single buffered']
    #allocation3 [shape = 's32[1]{0}', space=sflag, size = 0x4, scoped, tag = 'scoped memory for _metrics_from_slab.1']
    %6 = vsyncpa [#allocation3], 0
    // Predicated region
    $region2: #{_metrics_from_slab.1} parent=1 // pred_check
      _
    $region3: #{_metrics_from_slab.1} parent=1 // pred_check_branch
      %8 = sbr.rel (0) target = $region5
    $region4: #{_metrics_from_slab.1} parent=1 // pred_region
      %10 = vsyncadd [#allocation3], 0
      %s12 = sshll.u32 %s0, 4
      %s13 = int_to_ptr.hbm [resolvable:$true] %s12
      %s14 = sshll.u32 [#allocation2], 4
      %s15 = int_to_ptr.vmem [resolvable:$true] %s14
      %17 = dma.hbm_to_vmem [thread:$0]  %s13, 128, %s15, [#allocation3]
    $region5: #{_metrics_from_slab.1} parent=1 // pred_fallthru
      _
    // Predicated region
    $region6: #{_metrics_from_slab.1} parent=1 // pred_check
      _
    $region7: #{_metrics_from_slab.1} parent=1 // pred_check_branch
      %19 = sbr.rel (0) target = $region9
    $region8: #{_metrics_from_slab.1} parent=1 // pred_region
      %21 = dma.done [#allocation3], 128
    $region9: #{_metrics_from_slab.1} parent=1 // pred_fallthru
      _
    %p22 = scmp.eq.s32.totalorder 0, 0
    // Predicated region
    $region10: #{_metrics_from_slab.1} parent=1 // pred_check
      %p23 = pneg %p22
    $region11: #{_metrics_from_slab.1} parent=1 // pred_check_branch
      %25 = sbr.rel (%p23) target = $region13
    $region12: #{_metrics_from_slab.1} parent=1 // pred_region
      %26 = vst [vmem:[%s1] sm:$0xff] 0.0
    $region13: #{_metrics_from_slab.1} parent=1 // pred_fallthru
      _
    %v27 = vld [vmem:[#allocation2] sm:$0xff]
    %28 = vadd.xlane.f32.xlu0 %v27
    %v29 = vpop.xlane.xlu0 %28
    %v30 = vld [vmem:[%s1] sm:$0xff]
    %v31 = vadd.f32 %v30, %v29
    %32 = vst [vmem:[%s1] sm:$0xff] %v31
    // Predicated region
    $region14: #{_metrics_from_slab.1} parent=1 // pred_check
      _
    $region15: #{_metrics_from_slab.1} parent=1 // pred_check_branch
      %34 = sbr.rel (0) target = $region17
    $region16: #{_metrics_from_slab.1} parent=1 // pred_region
      _
    $region17: #{_metrics_from_slab.1} parent=1 // pred_fallthru
      _
    // Predicated region
    $region18: #{_metrics_from_slab.1} parent=1 // pred_check
      _
    $region19: #{_metrics_from_slab.1} parent=1 // pred_check_branch
      %36 = sbr.rel (0) target = $region21
    $region20: #{_metrics_from_slab.1} parent=1 // pred_region
      _
    $region21: #{_metrics_from_slab.1} parent=1 // pred_fallthru
      _
    %37 = vsyncpa [#allocation3], 1

</llo_original>
